<compile_context>
chip_gen: v7x
topology: tpu7x:2x2x1
jax: 0.10.0
libtpu: 0.0.40
codegen_flags: <defaults>
</compile_context>

<pallas_src>
import numpy as np
import jax
import jax.numpy as jnp
from jax.experimental import pallas as pl
from jax.experimental.pallas import tpu as pltpu


_LANES = 128
_TARGET_TILE_BYTES = 4 * 1024 * 1024    # per operand, per pipeline buffer
_VMEM_LIMIT_BYTES = 32 * 1024 * 1024    # fits v7x scoped default; raises v5e/v6e


def _round_up(x, m):
    return ((x + m - 1) // m) * m


# ---------------------------------------------------------------------------
# Pallas kernel: CFG blend on one tile.  scale_ref has singleton trailing dims
# and broadcasts over the data tile; blend accumulates in f32 (bf16-safe).
# ---------------------------------------------------------------------------
def _cfg_kernel(scale_ref, out_ref, ou_ref, res_ref):
    s = scale_ref[...]                            # f32, broadcasts over tile
    o = out_ref[...].astype(jnp.float32)
    u = ou_ref[...].astype(jnp.float32)
    res_ref[...] = (u + s * (o - u)).astype(res_ref.dtype)


def _cfg_combine_impl(out, out_uncond, scale):
    """out_uncond + scale.reshape(-1,1,1,1) * (out - out_uncond), via Pallas."""
    assert out.shape == out_uncond.shape
    if out_uncond.dtype != out.dtype:            # required for output aliasing
        out_uncond = out_uncond.astype(out.dtype)

    orig_shape = out.shape
    B = orig_shape[0]
    N = int(np.prod(orig_shape[1:]))
    itemsize = jnp.dtype(out.dtype).itemsize
    scale_f32 = jnp.asarray(scale, jnp.float32).reshape(B)

    if N % _LANES == 0:
        # ---------------- lane-aligned path: (B, R, 128), tiles span batches
        R = N // _LANES
        out3 = out.reshape(B, R, _LANES)
        ou3 = out_uncond.reshape(B, R, _LANES)
        scale3 = scale_f32.reshape(B, 1, 1)

        row_bytes = R * _LANES * itemsize
        if row_bytes >= _TARGET_TILE_BYTES:
            # A single batch row already fills the byte budget: tile its rows.
            tb = 1
            tr = max(8, (_TARGET_TILE_BYTES // (_LANES * itemsize)) // 8 * 8)
            tr = min(tr, R)
        else:
            # Pack several whole batch rows per tile.
            tr = R
            tb = max(1, min(B, _TARGET_TILE_BYTES // row_bytes))
            if tb >= B:
                if B >= 2:
                    tb = -(-B // 2)              # >=2 batch tiles (v7x megacore)
                elif R >= 16:
                    tr = min(R, _round_up(-(-R // 2), 8))   # split rows instead
        grid = (pl.cdiv(B, tb), pl.cdiv(R, tr))

        res = pl.pallas_call(
            _cfg_kernel,
            out_shape=jax.ShapeDtypeStruct((B, R, _LANES), out.dtype),
            grid=grid,
            in_specs=[
                pl.BlockSpec((tb, 1, 1), lambda b, r: (b, 0, 0)),       # scale
                pl.BlockSpec((tb, tr, _LANES), lambda b, r: (b, r, 0)),  # out
                pl.BlockSpec((tb, tr, _LANES), lambda b, r: (b, r, 0)),  # uncond
            ],
            out_specs=pl.BlockSpec((tb, tr, _LANES), lambda b, r: (b, r, 0)),
            # out_uncond (input 2) is dead after the blend -> reuse its buffer.
            # Safe: out_spec identical to its in_spec, dtypes equal.
            input_output_aliases={2: 0},
            compiler_params=pltpu.CompilerParams(
                dimension_semantics=("parallel", "parallel"),
                vmem_limit_bytes=_VMEM_LIMIT_BYTES),
        )(scale3, out3, ou3)
        return res.reshape(orig_shape)

    # ---------------- ragged path: keep (B, N) unpadded, full-last-dim blocks.
    # No wrapper-side pad / slice => no extra HBM passes; last lane group of
    # each store is masked by Pallas.
    out2 = out.reshape(B, N)
    ou2 = out_uncond.reshape(B, N)
    scale2 = scale_f32.reshape(B, 1)

    row_budget = max(1, _TARGET_TILE_BYTES // max(1, N * itemsize))
    if row_budget >= B or B <= 8:
        tb = B                                  # full batch dim in one block
    else:
        tb = max(8, (min(row_budget, B) // 8) * 8)
    grid = (pl.cdiv(B, tb),)
    # TODO(synk): if a single unaligned row ever exceeds several MiB, tile the
    # feature dim with an in-kernel masked tail instead of full-row blocks.

    res = pl.pallas_call(
        _cfg_kernel,
        out_shape=jax.ShapeDtypeStruct((B, N), out.dtype),
        grid=grid,
        in_specs=[
            pl.BlockSpec((tb, 1), lambda b: (b, 0)),   # scale
            pl.BlockSpec((tb, N), lambda b: (b, 0)),   # out
            pl.BlockSpec((tb, N), lambda b: (b, 0)),   # out_uncond
        ],
        out_specs=pl.BlockSpec((tb, N), lambda b: (b, 0)),
        input_output_aliases={2: 0},
        compiler_params=pltpu.CompilerParams(
            dimension_semantics=("parallel",),
            vmem_limit_bytes=_VMEM_LIMIT_BYTES),
    )(scale2, out2, ou2)
    return res.reshape(orig_shape)


cfg_combine = jax.jit(_cfg_combine_impl)


# ---------------------------------------------------------------------------
# Deterministic synthetic wrapped model (stand-in for the diffusion model).
# Not part of the module being translated; only produces out / out_uncond.
# ---------------------------------------------------------------------------
class SyntheticMDM:
    cond_mask_prob = 0.1  # > 0, as required by the wrapper's assert

    def __init__(self, njoints, nfeats, nframes, key):
        k1, k2, k3 = jax.random.split(key, 3)
        self.njoints, self.nfeats, self.nframes = njoints, nfeats, nframes
        self.W = jax.random.normal(k1, (njoints, njoints), jnp.float32) * 0.1
        self.t_emb = jax.random.normal(k2, (1000,), jnp.float32)
        self.cond_emb = jax.random.normal(
            k3, (njoints, nfeats, nframes), jnp.float32) * 0.5

    def __call__(self, x, timesteps, y):
        # x: [B, J, F, T]
        h = jnp.einsum('bjft,jk->bkft', x, self.W)
        h = h + self.t_emb[timesteps][:, None, None, None]
        if not y.get('uncond', False):
            h = h + self.cond_emb[None]
        return h


# ---------------------------------------------------------------------------
# JAX/Pallas port of ClassifierFreeSampleModel
# ---------------------------------------------------------------------------
class ClassifierFreeSampleModel:
    def __init__(self, model):
        assert model.cond_mask_prob > 0, (
            'Cannot run a guided diffusion on a model that has not been '
            'trained with no conditions')
        self.model = model

    def forward(self, x, timesteps, y=None):
        y_uncond = dict(y)
        y_uncond['uncond'] = True
        out = self.model(x, timesteps, y)
        out_uncond = self.model(x, timesteps, y_uncond)
        # hot path: CFG combine done in the Pallas kernel
        return cfg_combine(out, out_uncond, y['scale'])


if __name__ == "__main__":
    key = jax.random.PRNGKey(0)
    kx, ks, km, ko = jax.random.split(key, 4)

    B, J, F, T = 2, 4, 16, 16            # batch, njoints, nfeats, nframes
    x = jax.random.normal(kx, (B, J, F, T), jnp.float32)
    timesteps = jnp.array([7, 42], dtype=jnp.int32)
    scale = jnp.abs(jax.random.normal(ks, (B,), jnp.float32)) + 1.0
    y = {'scale': scale}

    model = SyntheticMDM(J, F, T, km)
    cfg = ClassifierFreeSampleModel(model)

    result = cfg.forward(x, timesteps, y)
    result = jax.block_until_ready(result)

    # pure-JAX reference for correctness
    out = model(x, timesteps, y)
    out_uncond = model(x, timesteps, {**y, 'uncond': True})
    ref = out_uncond + scale.reshape(-1, 1, 1, 1) * (out - out_uncond)

    assert result.shape == (B, J, F, T)
    np.testing.assert_allclose(np.asarray(result), np.asarray(ref),
                               rtol=1e-6, atol=1e-6)

    # Non-128-aligned feature size exercises the unpadded ragged path.
    a = jax.random.normal(ko, (2, 5, 3, 7), jnp.float32)
    b2 = jax.random.normal(jax.random.fold_in(ko, 1), (2, 5, 3, 7), jnp.float32)
    s2 = jnp.array([1.5, 0.25], jnp.float32)
    got = jax.block_until_ready(cfg_combine(a, b2, s2))
    want = b2 + s2.reshape(-1, 1, 1, 1) * (a - b2)
    np.testing.assert_allclose(np.asarray(got), np.asarray(want),
                               rtol=1e-6, atol=1e-6)

    # bf16 inputs exercise byte-based tiling + f32 accumulation with cast-at-store.
    a16 = jax.random.normal(jax.random.fold_in(ko, 2), (2, 8, 16, 32),
                            jnp.float32).astype(jnp.bfloat16)
    b16 = jax.random.normal(jax.random.fold_in(ko, 3), (2, 8, 16, 32),
                            jnp.float32).astype(jnp.bfloat16)
    s16 = jnp.array([2.0, 0.5], jnp.float32)
    got16 = jax.block_until_ready(cfg_combine(a16, b16, s16))
    want16 = (b16.astype(jnp.float32)
              + s16.reshape(-1, 1, 1, 1)
              * (a16.astype(jnp.float32) - b16.astype(jnp.float32)))
    assert got16.dtype == jnp.bfloat16
    np.testing.assert_allclose(np.asarray(got16, dtype=np.float32),
                               np.asarray(want16), rtol=2e-2, atol=2e-2)

    print("KERNEL_OK")
</pallas_src>

<mosaic_0001>
module attributes {stable_mosaic.version = 11 : i64} {
  func.func @_cfg_kernel(%arg0: i32, %arg1: i32, %arg2: memref<1x1x1xf32, #tpu.memory_space<vmem>>, %arg3: memref<1x8x128xf32, #tpu.memory_space<vmem>>, %arg4: memref<1x8x128xf32, #tpu.memory_space<vmem>>, %arg5: memref<1x8x128xf32, #tpu.memory_space<vmem>>) attributes {dimension_semantics = [#tpu.dimension_semantics<parallel>, #tpu.dimension_semantics<parallel>], iteration_bounds = array<i64: 2, 1>, scalar_prefetch = 0 : i64, scratch_operands = 0 : i64, tpu.core_type = #tpu.core_type<tc>, window_params = [{transform_indices = @transform_0, window_bounds = array<i64: 1, 1, 1>}, {transform_indices = @transform_1, window_bounds = array<i64: 1, 8, 128>}, {transform_indices = @transform_2, window_bounds = array<i64: 1, 8, 128>}, {transform_indices = @transform_3, window_bounds = array<i64: 1, 8, 128>}]} {
    %c0 = arith.constant 0 : index
    %c0_0 = arith.constant 0 : index
    %c0_1 = arith.constant 0 : index
    %0 = vector.load %arg2[%c0, %c0_0, %c0_1] : memref<1x1x1xf32, #tpu.memory_space<vmem>>, vector<1x1x1xf32>
    %c0_2 = arith.constant 0 : index
    %c0_3 = arith.constant 0 : index
    %c0_4 = arith.constant 0 : index
    %1 = vector.load %arg3[%c0_2, %c0_3, %c0_4] : memref<1x8x128xf32, #tpu.memory_space<vmem>>, vector<1x8x128xf32>
    %c0_5 = arith.constant 0 : index
    %c0_6 = arith.constant 0 : index
    %c0_7 = arith.constant 0 : index
    %2 = vector.load %arg4[%c0_5, %c0_6, %c0_7] : memref<1x8x128xf32, #tpu.memory_space<vmem>>, vector<1x8x128xf32>
    %3 = arith.subf %1, %2 : vector<1x8x128xf32>
    %4 = vector.broadcast %0 : vector<1x1x1xf32> to vector<1x8x128xf32>
    %5 = arith.mulf %4, %3 : vector<1x8x128xf32>
    %6 = arith.addf %2, %5 : vector<1x8x128xf32>
    %c0_8 = arith.constant 0 : index
    %c0_9 = arith.constant 0 : index
    %c0_10 = arith.constant 0 : index
    %7 = vector.load %arg5[%c0_8, %c0_9, %c0_10] : memref<1x8x128xf32, #tpu.memory_space<vmem>>, vector<1x8x128xf32>
    tpu.vector_store %arg5[%c0_8, %c0_9, %c0_10], %6 {strides = array<i32>} : memref<1x8x128xf32, #tpu.memory_space<vmem>>, vector<1x8x128xf32>,
    return
  }
  func.func @transform_0(%arg0: i32, %arg1: i32) -> (i32, i32, i32) {
    %c0_i32 = arith.constant 0 : i32
    %c0_i32_0 = arith.constant 0 : i32
    %c0_i32_1 = arith.constant 0 : i32
    return %arg0, %c0_i32, %c0_i32_0 : i32, i32, i32
  }
  func.func @transform_1(%arg0: i32, %arg1: i32) -> (i32, i32, i32) {
    %c0_i32 = arith.constant 0 : i32
    %c0_i32_0 = arith.constant 0 : i32
    return %arg0, %arg1, %c0_i32 : i32, i32, i32
  }
  func.func @transform_2(%arg0: i32, %arg1: i32) -> (i32, i32, i32) {
    %c0_i32 = arith.constant 0 : i32
    %c0_i32_0 = arith.constant 0 : i32
    return %arg0, %arg1, %c0_i32 : i32, i32, i32
  }
  func.func @transform_3(%arg0: i32, %arg1: i32) -> (i32, i32, i32) {
    %c0_i32 = arith.constant 0 : i32
    %c0_i32_0 = arith.constant 0 : i32
    return %arg0, %arg1, %c0_i32 : i32, i32, i32
  }
}

</mosaic_0001>

<llo_original>
// kernel: _cfg_combine_impl.1
$region0: #{_cfg_combine_impl.1}
  #allocation0 [shape = 'u32[]', space=smem, size = 0x4, offset = 0x4, fixed_abs, tag = 'smem constant byte address 0x4 - core index']
  #allocation1 [shape = 'u32[144,128]{1,0:T(1,128)}', space=vmem, size = 0x12000, scoped, tag = 'internal scratch']
  %s0 = inlined_call_operand.vmem [shape: f32[2,1,1], index: 0, kind: input, shape index: {}]
  %s1 = inlined_call_operand.vmem [shape: f32[2,8,128], index: 1, kind: input, shape index: {}]
  %s2 = inlined_call_operand.vmem [shape: f32[2,8,128], index: 2, kind: input, shape index: {}, may-alias: {2,3}]
  %s3 = inlined_call_operand.vmem [shape: f32[2,8,128], index: 3, kind: output, shape index: {}, may-alias: {2,3}]
  %s4 = sld [smem:[#allocation0]]
  $region45: #{_cfg_combine_impl.1} parent=0
    _
  %s6 = ssub.s32 1, %s4
  %s7 = scalar_select 0, %s6, %s4
  loop: start=0, step=1, limit=4
  $region2: #{_cfg_combine_impl.1} parent=0 // loop_pre_header
    _
  $region3: #{_cfg_combine_impl.1} parent=0 // loop_header
    %s9 = sphi 0, %s13
    %p10 = scmp.ge.s32.totalorder %s9, 4
    %s16 = sphi 0, %s28
    %s17 = sphi 0, %s24
    %s18 = sphi 0, %s16
    %s19 = sphi 0, %s17
    %s20 = sphi 0, %s18
    %s21 = sphi 0, %s19
    %s31 = sphi 0, %s33
    %s34 = sphi 0, %s31
    %s35 = sphi 0, %s34
    %s51 = sphi 0, %s35
    %s59 = sphi 0, %s61
    %s62 = sphi 0, %s59
    %s63 = sphi 0, %s62
    %s79 = sphi 0, %s63
    %s87 = sphi 0, %s89
    %s90 = sphi 0, %s87
    %s91 = sphi 0, %s90
    %s107 = sphi 0, %s91
    %s115 = sphi 0, %s117
    %s118 = sphi 0, %s115
    %s119 = sphi 0, %s118
    %s135 = sphi 0, %s119
  $region4: #{_cfg_combine_impl.1} parent=0 // loop_header_branch
    %12 = sbr.rel (%p10) target = $region8
  $region5: #{_cfg_combine_impl.1} parent=0 // loop_body
    %s14 = ssub.s32 %s9, 1
    %s15 = ssub.s32 %s9, 2
    %s22 = sadd.s32 1, %s17
    %p23 = scmp.ge.s32.totalorder %s22, 1
    %s24 = scalar_select %p23, 0, %s22
    %s25 = sadd.s32 1, %s16
    %s26 = scalar_select %p23, %s25, %s16
    %p27 = scmp.ge.s32.totalorder %s26, 2
    %s28 = scalar_select %p27, 0, %s26
    %s29 = ssub.s32 %s16, %s28
    %p30 = scmp.eq.s32.totalorder %s29, 0
    %s32 = sadd.s32 %s31, 1
    %s33 = scalar_select %p30, %s31, %s32
    %p36 = pneg %p30
    %p37 = scmp.eq.s32.totalorder %s9, 1
    %p38 = por %p36, %p37
    %p39 = scmp.ne.s32.totalorder %s31, %s34
    %p40 = scmp.eq.s32.totalorder %s9, 0
    %p41 = por %p39, %p40
    %p42 = scmp.ne.s32.totalorder %s31, %s34
    %p43 = scmp.eq.s32.totalorder %s14, 1
    %p44 = por %p42, %p43
    %p45 = scmp.ne.s32.totalorder %s34, %s35
    %p46 = scmp.eq.s32.totalorder %s14, 0
    %p47 = por %p45, %p46
    %p48 = scmp.ne.s32.totalorder %s34, %s35
    %p49 = scmp.eq.s32.totalorder %s15, 1
    %p50 = por %p48, %p49
    %p52 = scmp.ne.s32.totalorder %s35, %s51
    %p53 = scmp.eq.s32.totalorder %s15, 0
    %p54 = por %p52, %p53
    %s55 = ssub.s32 %s16, %s28
    %s56 = ssub.s32 %s17, %s24
    %s57 = sor.u32 %s55, %s56
    %p58 = scmp.eq.s32.totalorder %s57, 0
    %s60 = sadd.s32 %s59, 1
    %s61 = scalar_select %p58, %s59, %s60
    %p64 = pneg %p58
    %p65 = scmp.eq.s32.totalorder %s9, 1
    %p66 = por %p64, %p65
    %p67 = scmp.ne.s32.totalorder %s59, %s62
    %p68 = scmp.eq.s32.totalorder %s9, 0
    %p69 = por %p67, %p68
    %p70 = scmp.ne.s32.totalorder %s59, %s62
    %p71 = scmp.eq.s32.totalorder %s14, 1
    %p72 = por %p70, %p71
    %p73 = scmp.ne.s32.totalorder %s62, %s63
    %p74 = scmp.eq.s32.totalorder %s14, 0
    %p75 = por %p73, %p74
    %p76 = scmp.ne.s32.totalorder %s62, %s63
    %p77 = scmp.eq.s32.totalorder %s15, 1
    %p78 = por %p76, %p77
    %p80 = scmp.ne.s32.totalorder %s63, %s79
    %p81 = scmp.eq.s32.totalorder %s15, 0
    %p82 = por %p80, %p81
    %s83 = ssub.s32 %s16, %s28
    %s84 = ssub.s32 %s17, %s24
    %s85 = sor.u32 %s83, %s84
    %p86 = scmp.eq.s32.totalorder %s85, 0
    %s88 = sadd.s32 %s87, 1
    %s89 = scalar_select %p86, %s87, %s88
    %p92 = pneg %p86
    %p93 = scmp.eq.s32.totalorder %s9, 1
    %p94 = por %p92, %p93
    %p95 = scmp.ne.s32.totalorder %s87, %s90
    %p96 = scmp.eq.s32.totalorder %s9, 0
    %p97 = por %p95, %p96
    %p98 = scmp.ne.s32.totalorder %s87, %s90
    %p99 = scmp.eq.s32.totalorder %s14, 1
    %p100 = por %p98, %p99
    %p101 = scmp.ne.s32.totalorder %s90, %s91
    %p102 = scmp.eq.s32.totalorder %s14, 0
    %p103 = por %p101, %p102
    %p104 = scmp.ne.s32.totalorder %s90, %s91
    %p105 = scmp.eq.s32.totalorder %s15, 1
    %p106 = por %p104, %p105
    %p108 = scmp.ne.s32.totalorder %s91, %s107
    %p109 = scmp.eq.s32.totalorder %s15, 0
    %p110 = por %p108, %p109
    %s111 = ssub.s32 %s16, %s28
    %s112 = ssub.s32 %s17, %s24
    %s113 = sor.u32 %s111, %s112
    %p114 = scmp.eq.s32.totalorder %s113, 0
    %s116 = sadd.s32 %s115, 1
    %s117 = scalar_select %p114, %s115, %s116
    %p120 = pneg %p114
    %p121 = scmp.eq.s32.totalorder %s9, 1
    %p122 = por %p120, %p121
    %p123 = scmp.ne.s32.totalorder %s115, %s118
    %p124 = scmp.eq.s32.totalorder %s9, 0
    %p125 = por %p123, %p124
    %p126 = scmp.ne.s32.totalorder %s115, %s118
    %p127 = scmp.eq.s32.totalorder %s14, 1
    %p128 = por %p126, %p127
    %p129 = scmp.ne.s32.totalorder %s118, %s119
    %p130 = scmp.eq.s32.totalorder %s14, 0
    %p131 = por %p129, %p130
    %p132 = scmp.ne.s32.totalorder %s118, %s119
    %p133 = scmp.eq.s32.totalorder %s15, 1
    %p134 = por %p132, %p133
    %p136 = scmp.ne.s32.totalorder %s119, %s135
    %p137 = scmp.eq.s32.totalorder %s15, 0
    %p138 = por %p136, %p137
    %p139 = scmp.le.s32.totalorder 1, %s9
    %p140 = scmp.lt.s32.totalorder %s9, 3
    %p141 = pnand %p139, %p140
    %p142 = pneg %p141
    // Predicated region
    $region9: #{_cfg_combine_impl.1} parent=5 // pred_check
      _
    $region10: #{_cfg_combine_impl.1} parent=5 // pred_check_branch
      %144 = sbr.rel (%p141) target = $region12
    $region11: #{_cfg_combine_impl.1} parent=5 // pred_region
      %s145 = ssub.s32 %s9, 1
    $region12: #{_cfg_combine_impl.1} parent=5 // pred_fallthru
      _
    %p146 = scmp.lt.s32.totalorder %s9, 2
    // Predicated region
    $region13: #{_cfg_combine_impl.1} parent=5 // pred_check
      %p147 = pneg %p146
    $region14: #{_cfg_combine_impl.1} parent=5 // pred_check_branch
      %149 = sbr.rel (%p147) target = $region16
    $region15: #{_cfg_combine_impl.1} parent=5 // pred_region
      // Predicated region
      $region17: #{_cfg_combine_impl.1} parent=15 // pred_check
        %p150 = pneg %p41
      $region18: #{_cfg_combine_impl.1} parent=15 // pred_check_branch
        %152 = sbr.rel (%p150) target = $region20
      $region19: #{_cfg_combine_impl.1} parent=15 // pred_region
        %p153 = scmp.lt.s32.totalorder %s16, 1
        %s154 = scalar_select %p153, %s16, 1
        %s155 = scalar_lea.vmem %s0, %s154
      $region20: #{_cfg_combine_impl.1} parent=15 // pred_fallthru
        _
      // Predicated region
      $region21: #{_cfg_combine_impl.1} parent=15 // pred_check
        %p156 = pneg %p69
      $region22: #{_cfg_combine_impl.1} parent=15 // pred_check_branch
        %158 = sbr.rel (%p156) target = $region24
      $region23: #{_cfg_combine_impl.1} parent=15 // pred_region
        %p159 = scmp.lt.s32.totalorder %s16, 1
        %s160 = scalar_select %p159, %s16, 1
        %p161 = scmp.lt.s32.totalorder %s17, 0
        %s162 = scalar_select %p161, %s17, 0
        %s163 = sadd.s32 %s162, %s160
        %s164 = smul.addr %s163, 8
        %s165 = scalar_lea.vmem %s1, %s164
      $region24: #{_cfg_combine_impl.1} parent=15 // pred_fallthru
        _
      // Predicated region
      $region25: #{_cfg_combine_impl.1} parent=15 // pred_check
        %p166 = pneg %p97
      $region26: #{_cfg_combine_impl.1} parent=15 // pred_check_branch
        %168 = sbr.rel (%p166) target = $region28
      $region27: #{_cfg_combine_impl.1} parent=15 // pred_region
        %p169 = scmp.lt.s32.totalorder %s16, 1
        %s170 = scalar_select %p169, %s16, 1
        %p171 = scmp.lt.s32.totalorder %s17, 0
        %s172 = scalar_select %p171, %s17, 0
        %s173 = sadd.s32 %s172, %s170
        %s174 = smul.addr %s173, 8
        %s175 = scalar_lea.vmem %s2, %s174
      $region28: #{_cfg_combine_impl.1} parent=15 // pred_fallthru
        _
    $region16: #{_cfg_combine_impl.1} parent=5 // pred_fallthru
      _
    %p176 = scmp.le.s32.totalorder 1, %s9
    %p177 = scmp.lt.s32.totalorder %s9, 3
    %p178 = pnand %p176, %p177
    %p179 = pneg %p178
    // Predicated region
    $region29: #{_cfg_combine_impl.1} parent=5 // pred_check
      _
    $region30: #{_cfg_combine_impl.1} parent=5 // pred_check_branch
      %181 = sbr.rel (%p178) target = $region32
    $region31: #{_cfg_combine_impl.1} parent=5 // pred_region
      %s182 = ssub.s32 %s9, 1
      %p183 = scmp.lt.s32.totalorder %s18, 1
      %s184 = scalar_select %p183, %s18, 1
      %s185 = scalar_lea.vmem %s0, %s184
      %p186 = pneg %p47
      %p187 = pneg %p44
      %p188 = scmp.lt.s32.totalorder %s18, 1
      %s189 = scalar_select %p188, %s18, 1
      %p190 = scmp.lt.s32.totalorder %s19, 0
      %s191 = scalar_select %p190, %s19, 0
      %s192 = sadd.s32 %s191, %s189
      %s193 = smul.addr %s192, 8
      %s194 = scalar_lea.vmem %s1, %s193
      %p195 = pneg %p75
      %p196 = pneg %p72
      %p197 = scmp.lt.s32.totalorder %s18, 1
      %s198 = scalar_select %p197, %s18, 1
      %p199 = scmp.lt.s32.totalorder %s19, 0
      %s200 = scalar_select %p199, %s19, 0
      %s201 = sadd.s32 %s200, %s198
      %s202 = smul.addr %s201, 8
      %s203 = scalar_lea.vmem %s2, %s202
      %p204 = pneg %p103
      %p205 = pneg %p100
      %p206 = pneg %p131
      %p207 = pneg %p128
      %p208 = scmp.lt.s32.totalorder %s18, 1
      %s209 = scalar_select %p208, %s18, 1
      %p210 = scmp.lt.s32.totalorder %s19, 0
      %s211 = scalar_select %p210, %s19, 0
      %s212 = sadd.s32 %s211, %s209
      %s213 = smul.addr %s212, 8
      %s214 = scalar_lea.vmem %s3, %s213
      %p215 = scmp.lt.s32.totalorder %s18, 1
      %s216 = scalar_select %p215, %s18, 1
      %s217 = scalar_lea.vmem %s0, %s216
      %p218 = scmp.lt.s32.totalorder %s18, 1
      %s219 = scalar_select %p218, %s18, 1
      %p220 = scmp.lt.s32.totalorder %s19, 0
      %s221 = scalar_select %p220, %s19, 0
      %s222 = sadd.s32 %s221, %s219
      %s223 = smul.addr %s222, 8
      %s224 = scalar_lea.vmem %s1, %s223
      %p225 = scmp.lt.s32.totalorder %s18, 1
      %s226 = scalar_select %p225, %s18, 1
      %p227 = scmp.lt.s32.totalorder %s19, 0
      %s228 = scalar_select %p227, %s19, 0
      %s229 = sadd.s32 %s228, %s226
      %s230 = smul.addr %s229, 8
      %s231 = scalar_lea.vmem %s2, %s230
      %p232 = scmp.lt.s32.totalorder %s18, 1
      %s233 = scalar_select %p232, %s18, 1
      %p234 = scmp.lt.s32.totalorder %s19, 0
      %s235 = scalar_select %p234, %s19, 0
      %s236 = sadd.s32 %s235, %s233
      %s237 = smul.addr %s236, 8
      %s238 = scalar_lea.vmem %s3, %s237
      %v239 = vld [vmem:[%s217] sm:$0x1]
      %v240 = vld [vmem:[%s224] sm:$0xff]
      %v241 = vld [vmem:[%s231] sm:$0xff]
      %v242 = vsub.f32 %v240, %v241
      %v244 = vlaneseq
      %v245 = vshrl.u32 %v244, 7
      %v246 = vsub.s32 0, %v245
      %v247 = vrot.slane %v239, %v246
      %248 = vset.pattern.permute.xlu0 0
      %249 = vperm.xlu0 %248, %v247
      %v250 = vpop.permute.xlu0 %249
      %v252 = vmul.f32 %v250, %v242
      %v253 = vadd.f32 %v241, %v252
      %254 = vst [vmem:[%s238] sm:$0xff] %v253
      %p255 = scmp.lt.s32.totalorder %s18, 1
      %s256 = scalar_select %p255, %s18, 1
      %p257 = scmp.lt.s32.totalorder %s19, 0
      %s258 = scalar_select %p257, %s19, 0
      %s259 = sadd.s32 %s258, %s256
      %s260 = smul.addr %s259, 8
      %s261 = scalar_lea.vmem %s3, %s260
      // Predicated region
      $region33: #{_cfg_combine_impl.1} parent=31 // pred_check
        %p262 = pneg %p128
      $region34: #{_cfg_combine_impl.1} parent=31 // pred_check_branch
        %264 = sbr.rel (%p262) target = $region36
      $region35: #{_cfg_combine_impl.1} parent=31 // pred_region
        _
      $region36: #{_cfg_combine_impl.1} parent=31 // pred_fallthru
        _
    $region32: #{_cfg_combine_impl.1} parent=5 // pred_fallthru
      _
    %p265 = scmp.le.s32.totalorder 2, %s9
    // Predicated region
    $region37: #{_cfg_combine_impl.1} parent=5 // pred_check
      %p266 = pneg %p265
    $region38: #{_cfg_combine_impl.1} parent=5 // pred_check_branch
      %268 = sbr.rel (%p266) target = $region40
    $region39: #{_cfg_combine_impl.1} parent=5 // pred_region
      %s269 = ssub.s32 %s9, 2
      // Predicated region
      $region41: #{_cfg_combine_impl.1} parent=39 // pred_check
        %p270 = pneg %p134
      $region42: #{_cfg_combine_impl.1} parent=39 // pred_check_branch
        %272 = sbr.rel (%p270) target = $region44
      $region43: #{_cfg_combine_impl.1} parent=39 // pred_region
        %p273 = scmp.lt.s32.totalorder %s20, 1
        %s274 = scalar_select %p273, %s20, 1
        %p275 = scmp.lt.s32.totalorder %s21, 0
        %s276 = scalar_select %p275, %s21, 0
        %s277 = sadd.s32 %s276, %s274
        %s278 = smul.addr %s277, 8
        %s279 = scalar_lea.vmem %s3, %s278
      $region44: #{_cfg_combine_impl.1} parent=39 // pred_fallthru
        _
    $region40: #{_cfg_combine_impl.1} parent=5 // pred_fallthru
      _
  $region6: #{_cfg_combine_impl.1} parent=0 // loop_footer
    %s13 = sadd.s32 1, %s9
  $region7: #{_cfg_combine_impl.1} parent=0 // loop_footer_branch
    %8 = sbr.rel target = $region3
  $region8: #{_cfg_combine_impl.1} parent=0 // loop_exit
    _

</llo_original>
